<compile_context>
chip_gen: v7x
topology: tpu7x:2x2x1
jax: 0.10.0
libtpu: 0.0.40
codegen_flags: <defaults>
</compile_context>

<pallas_src>
import numpy as np
import jax
import jax.numpy as jnp
from jax.experimental import pallas as pl
from jax.experimental.pallas import tpu as pltpu


def _round_up(x, m):
    return pl.cdiv(x, m) * m


# ----------------------------------------------------------------------------
# Parameter construction (plain numpy) — mirrors InputLayer.__init__.  The COO
# tensor sums duplicate (row, col) entries when used in mm, so we materialize
# it densely with a scatter-add.
# ----------------------------------------------------------------------------
def make_input_layer_weight(N, dim_input, dim_output, weight=100.0, seed=0):
    rng = np.random.default_rng(seed)  # deterministic stand-in for np.random
    pre = np.arange(dim_input * N) % dim_input
    post = rng.permutation(max(dim_input, dim_output) * N)[: dim_input * N] % dim_output
    W = np.zeros((dim_input, dim_output), dtype=np.float32)
    np.add.at(W, (pre, post), np.float32(weight))
    return jnp.asarray(W)


# ----------------------------------------------------------------------------
# Kernel: tiled (tile_b, tile_k) x (tile_k, Dout_p) MXU matmul with an f32 VMEM
# accumulator across the K grid axis (init at k==0, writeback at k==last).
# ----------------------------------------------------------------------------
def _input_layer_kernel(x_ref, w_ref, o_ref, acc_ref):
    k = pl.program_id(1)

    @pl.when(k == 0)
    def _init():
        acc_ref[...] = jnp.zeros_like(acc_ref)

    acc_ref[...] += jnp.dot(
        x_ref[...], w_ref[...], preferred_element_type=jnp.float32
    )

    @pl.when(k == pl.num_programs(1) - 1)
    def _writeback():
        o_ref[...] = acc_ref[...].astype(o_ref.dtype)


def _build_and_run(x_p, W_p, *, tile_b, tile_k, Dout_p, out_dtype, w_pipeline_mode):
    B_p, Din_p = x_p.shape
    num_b = B_p // tile_b
    num_k = Din_p // tile_k
    c_bytes = jnp.dtype(x_p.dtype).itemsize
    o_bytes = jnp.dtype(out_dtype).itemsize

    # VMEM budget: x double-buffered, W single- or double-buffered, output
    # double-buffered, plus the f32 accumulator.  Set the limit explicitly
    # (with 2x headroom) instead of relying on the conservative scoped default;
    # capped comfortably below v7x's 64 MiB physical VMEM.
    w_bufs = 1 if w_pipeline_mode is not None else 2
    needed = (
        2 * tile_b * tile_k * c_bytes
        + w_bufs * tile_k * Dout_p * c_bytes
        + 2 * tile_b * Dout_p * o_bytes
        + tile_b * Dout_p * 4
    )
    vmem_limit = int(min(max(2 * needed + (1 << 20), 16 << 20), 48 << 20))

    w_spec_kwargs = {}
    if w_pipeline_mode is not None:
        w_spec_kwargs["pipeline_mode"] = w_pipeline_mode

    cost = pl.CostEstimate(
        flops=2 * B_p * Din_p * Dout_p,
        transcendentals=0,
        bytes_accessed=c_bytes * (B_p * Din_p + Din_p * Dout_p)
        + o_bytes * B_p * Dout_p,
    )

    return pl.pallas_call(
        _input_layer_kernel,
        out_shape=jax.ShapeDtypeStruct((B_p, Dout_p), out_dtype),
        grid_spec=pltpu.PrefetchScalarGridSpec(
            num_scalar_prefetch=0,
            grid=(num_b, num_k),
            in_specs=[
                pl.BlockSpec((tile_b, tile_k), lambda i, k: (i, k)),
                pl.BlockSpec((tile_k, Dout_p), lambda i, k: (k, 0), **w_spec_kwargs),
            ],
            out_specs=pl.BlockSpec((tile_b, Dout_p), lambda i, k: (i, 0)),
            scratch_shapes=[pltpu.VMEM((tile_b, Dout_p), jnp.float32)],
        ),
        compiler_params=pltpu.CompilerParams(
            dimension_semantics=("parallel", "arbitrary"),
            vmem_limit_bytes=vmem_limit,
        ),
        cost_estimate=cost,
    )(x_p, W_p)


def input_layer_forward(x, W, *, tile_b=None, tile_k=None,
                        compute_dtype=jnp.bfloat16, out_dtype=jnp.float32):
    """y = x @ W computed in a Pallas TPU kernel (== InputLayer.forward)."""
    B, Din = x.shape
    Din_w, Dout = W.shape
    assert Din == Din_w

    # Lane-dense padding: last dims to multiples of 128 so the output store is
    # an unmasked vst and the MXU contraction dim is aligned.  Zero padding on
    # the contraction dim / extra batch rows leaves the (sliced) result exact.
    Dout_p = _round_up(Dout, 128)
    Din_p = _round_up(Din, 128)
    if tile_k is None:
        tile_k = min(Din_p, 512)
    tile_k = min(_round_up(tile_k, 128), Din_p)
    Din_p = _round_up(Din_p, tile_k)

    # Batch tile: multiple of 16 sublanes (bf16 packing), capped at 512 rows so
    # large batches keep the per-step working set inside VMEM and the grid gets
    # multiple parallel steps (megacore / v7x two-TC sharding).
    if tile_b is None:
        tile_b = min(_round_up(B, 16), 512)
    tile_b = _round_up(tile_b, 16)
    B_p = _round_up(B, tile_b)

    # bf16 operands, f32 accumulation: W entries are exact multiples of 100 so
    # the weight cast is lossless; halves HBM/VMEM bytes on v6e/v7x.
    # (On v5e an int8-count weight with a 100.0 rescale would cut W DMA 4x.)
    x_p = jnp.zeros((B_p, Din_p), compute_dtype).at[:B, :Din].set(
        x.astype(compute_dtype))
    W_p = jnp.zeros((Din_p, Dout_p), compute_dtype).at[:Din, :Dout].set(
        W.astype(compute_dtype))

    num_k = Din_p // tile_k
    # W is grid-invariant when there is a single K block: single-buffer it to
    # halve its VMEM footprint.
    w_mode = pl.Buffered(1) if num_k == 1 else None
    try:
        y_p = _build_and_run(x_p, W_p, tile_b=tile_b, tile_k=tile_k,
                             Dout_p=Dout_p, out_dtype=out_dtype,
                             w_pipeline_mode=w_mode)
    except Exception:
        # Graceful fallback if this JAX build rejects pipeline_mode=Buffered(1).
        y_p = _build_and_run(x_p, W_p, tile_b=tile_b, tile_k=tile_k,
                             Dout_p=Dout_p, out_dtype=out_dtype,
                             w_pipeline_mode=None)
    return y_p[:B, :Dout]


if __name__ == "__main__":
    # Small shapes consistent with the module: x is (batch, dim_input).
    N, dim_input, dim_output, batch, weight = 3, 32, 64, 8, 100.0

    W = make_input_layer_weight(N, dim_input, dim_output, weight=weight, seed=0)
    x = jax.random.normal(jax.random.PRNGKey(0), (batch, dim_input),
                          dtype=jnp.float32)

    y = jax.block_until_ready(input_layer_forward(x, W))
    assert y.shape == (batch, dim_output)

    # Reference: same math on bf16-quantized activations (weights are exact in
    # bf16) with f32 accumulation — matches the kernel's MXU path.
    x_q = np.asarray(x.astype(jnp.bfloat16).astype(jnp.float32))
    y_ref = x_q @ np.asarray(W, dtype=np.float32)
    np.testing.assert_allclose(np.asarray(y), y_ref, rtol=1e-5, atol=1e-3)

    # Second (still small) config that exercises the multi-step grid:
    # 3 batch tiles x 2 K tiles, with batch/Din/Dout padding + accumulation.
    B2, Din2, Dout2 = 48, 160, 192
    W2 = make_input_layer_weight(2, Din2, Dout2, weight=weight, seed=1)
    x2 = jax.random.normal(jax.random.PRNGKey(1), (B2, Din2), dtype=jnp.float32)
    y2 = jax.block_until_ready(input_layer_forward(x2, W2, tile_b=16, tile_k=128))
    assert y2.shape == (B2, Dout2)
    x2_q = np.asarray(x2.astype(jnp.bfloat16).astype(jnp.float32))
    y2_ref = x2_q @ np.asarray(W2, dtype=np.float32)
    np.testing.assert_allclose(np.asarray(y2), y2_ref, rtol=1e-5, atol=1e-2)

    print("KERNEL_OK")
</pallas_src>

<mosaic_0001>
module attributes {stable_mosaic.version = 11 : i64} {
  func.func @_input_layer_kernel(%arg0: i32, %arg1: i32, %arg2: memref<16x128xbf16, #tpu.memory_space<vmem>>, %arg3: memref<128x128xbf16, #tpu.memory_space<vmem>>, %arg4: memref<16x128xf32, #tpu.memory_space<vmem>>, %arg5: memref<16x128xf32, #tpu.memory_space<vmem>>) attributes {dimension_semantics = [#tpu.dimension_semantics<parallel>, #tpu.dimension_semantics<arbitrary>], iteration_bounds = array<i64: 1, 1>, scalar_prefetch = 0 : i64, scratch_operands = 1 : i64, tpu.core_type = #tpu.core_type<tc>, window_params = [{transform_indices = @transform_0, window_bounds = array<i64: 16, 128>}, {pipeline_mode = #tpu.pipeline_mode<synchronous>, transform_indices = @transform_1, window_bounds = array<i64: 128, 128>}, {transform_indices = @transform_2, window_bounds = array<i64: 16, 128>}]} {
    %c0_i32 = arith.constant 0 : i32
    %0 = arith.cmpi eq, %arg1, %c0_i32 : i32
    %1 = arith.extui %0 : i1 to i32
    %c0_i32_0 = arith.constant 0 : i32
    %2 = arith.cmpi ne, %1, %c0_i32_0 : i32
    scf.if %2 {
      %cst_10 = arith.constant 0.000000e+00 : f32
      %12 = vector.broadcast %cst_10 : f32 to vector<16x128xf32>
      %c0_11 = arith.constant 0 : index
      %c0_12 = arith.constant 0 : index
      %13 = vector.load %arg5[%c0_11, %c0_12] : memref<16x128xf32, #tpu.memory_space<vmem>>, vector<16x128xf32>
      tpu.vector_store %arg5[%c0_11, %c0_12], %12 {strides = array<i32>} : memref<16x128xf32, #tpu.memory_space<vmem>>, vector<16x128xf32>,
    } else {
    }
    %c0 = arith.constant 0 : index
    %c0_1 = arith.constant 0 : index
    %3 = vector.load %arg5[%c0, %c0_1] : memref<16x128xf32, #tpu.memory_space<vmem>>, vector<16x128xf32>
    %c0_2 = arith.constant 0 : index
    %c0_3 = arith.constant 0 : index
    %4 = vector.load %arg2[%c0_2, %c0_3] : memref<16x128xbf16, #tpu.memory_space<vmem>>, vector<16x128xbf16>
    %c0_4 = arith.constant 0 : index
    %c0_5 = arith.constant 0 : index
    %5 = vector.load %arg3[%c0_4, %c0_5] : memref<128x128xbf16, #tpu.memory_space<vmem>>, vector<128x128xbf16>
    %cst = arith.constant dense<0.000000e+00> : vector<16x128xf32>
    %6 = tpu.matmul %4, %5, %cst {dimension_numbers = #tpu.dot_dimension_numbers<[1], [0], [0], [1], [0, 0, 1, 1], [], []>} : vector<16x128xbf16>, vector<128x128xbf16>, vector<16x128xf32> -> vector<16x128xf32>
    %7 = arith.addf %3, %6 : vector<16x128xf32>
    %c0_6 = arith.constant 0 : index
    %c0_7 = arith.constant 0 : index
    %8 = vector.load %arg5[%c0_6, %c0_7] : memref<16x128xf32, #tpu.memory_space<vmem>>, vector<16x128xf32>
    tpu.vector_store %arg5[%c0_6, %c0_7], %7 {strides = array<i32>} : memref<16x128xf32, #tpu.memory_space<vmem>>, vector<16x128xf32>,
    %c0_i32_8 = arith.constant 0 : i32
    %9 = arith.cmpi eq, %arg1, %c0_i32_8 : i32
    %10 = arith.extui %9 : i1 to i32
    %c0_i32_9 = arith.constant 0 : i32
    %11 = arith.cmpi ne, %10, %c0_i32_9 : i32
    scf.if %11 {
      %c0_10 = arith.constant 0 : index
      %c0_11 = arith.constant 0 : index
      %12 = vector.load %arg5[%c0_10, %c0_11] : memref<16x128xf32, #tpu.memory_space<vmem>>, vector<16x128xf32>
      %c0_12 = arith.constant 0 : index
      %c0_13 = arith.constant 0 : index
      %13 = vector.load %arg4[%c0_12, %c0_13] : memref<16x128xf32, #tpu.memory_space<vmem>>, vector<16x128xf32>
      tpu.vector_store %arg4[%c0_12, %c0_13], %12 {strides = array<i32>} : memref<16x128xf32, #tpu.memory_space<vmem>>, vector<16x128xf32>,
    } else {
    }
    return
  }
  func.func @transform_0(%arg0: i32, %arg1: i32) -> (i32, i32) {
    %c0_i32 = arith.constant 0 : i32
    return %arg0, %arg1 : i32, i32
  }
  func.func @transform_1(%arg0: i32, %arg1: i32) -> (i32, i32) {
    %c0_i32 = arith.constant 0 : i32
    %c0_i32_0 = arith.constant 0 : i32
    return %arg1, %c0_i32 : i32, i32
  }
  func.func @transform_2(%arg0: i32, %arg1: i32) -> (i32, i32) {
    %c0_i32 = arith.constant 0 : i32
    %c0_i32_0 = arith.constant 0 : i32
    return %arg0, %c0_i32 : i32, i32
  }
}

module attributes {stable_mosaic.version = 11 : i64} {
  func.func @_input_layer_kernel(%arg0: i32, %arg1: i32, %arg2: memref<16x128xbf16, #tpu.memory_space<vmem>>, %arg3: memref<128x128xbf16, #tpu.memory_space<vmem>>, %arg4: memref<16x128xf32, #tpu.memory_space<vmem>>, %arg5: memref<16x128xf32, #tpu.memory_space<vmem>>) attributes {dimension_semantics = [#tpu.dimension_semantics<parallel>, #tpu.dimension_semantics<arbitrary>], iteration_bounds = array<i64: 1, 1>, scalar_prefetch = 0 : i64, scratch_operands = 1 : i64, tpu.core_type = #tpu.core_type<tc>, window_params = [{transform_indices = @transform_0, window_bounds = array<i64: 16, 128>}, {transform_indices = @transform_1, window_bounds = array<i64: 128, 128>}, {transform_indices = @transform_2, window_bounds = array<i64: 16, 128>}]} {
    %c0_i32 = arith.constant 0 : i32
    %0 = arith.cmpi eq, %arg1, %c0_i32 : i32
    %1 = arith.extui %0 : i1 to i32
    %c0_i32_0 = arith.constant 0 : i32
    %2 = arith.cmpi ne, %1, %c0_i32_0 : i32
    scf.if %2 {
      %cst_10 = arith.constant 0.000000e+00 : f32
      %12 = vector.broadcast %cst_10 : f32 to vector<16x128xf32>
      %c0_11 = arith.constant 0 : index
      %c0_12 = arith.constant 0 : index
      %13 = vector.load %arg5[%c0_11, %c0_12] : memref<16x128xf32, #tpu.memory_space<vmem>>, vector<16x128xf32>
      tpu.vector_store %arg5[%c0_11, %c0_12], %12 {strides = array<i32>} : memref<16x128xf32, #tpu.memory_space<vmem>>, vector<16x128xf32>,
    } else {
    }
    %c0 = arith.constant 0 : index
    %c0_1 = arith.constant 0 : index
    %3 = vector.load %arg5[%c0, %c0_1] : memref<16x128xf32, #tpu.memory_space<vmem>>, vector<16x128xf32>
    %c0_2 = arith.constant 0 : index
    %c0_3 = arith.constant 0 : index
    %4 = vector.load %arg2[%c0_2, %c0_3] : memref<16x128xbf16, #tpu.memory_space<vmem>>, vector<16x128xbf16>
    %c0_4 = arith.constant 0 : index
    %c0_5 = arith.constant 0 : index
    %5 = vector.load %arg3[%c0_4, %c0_5] : memref<128x128xbf16, #tpu.memory_space<vmem>>, vector<128x128xbf16>
    %cst = arith.constant dense<0.000000e+00> : vector<16x128xf32>
    %6 = tpu.matmul %4, %5, %cst {dimension_numbers = #tpu.dot_dimension_numbers<[1], [0], [0], [1], [0, 0, 1, 1], [], []>} : vector<16x128xbf16>, vector<128x128xbf16>, vector<16x128xf32> -> vector<16x128xf32>
    %7 = arith.addf %3, %6 : vector<16x128xf32>
    %c0_6 = arith.constant 0 : index
    %c0_7 = arith.constant 0 : index
    %8 = vector.load %arg5[%c0_6, %c0_7] : memref<16x128xf32, #tpu.memory_space<vmem>>, vector<16x128xf32>
    tpu.vector_store %arg5[%c0_6, %c0_7], %7 {strides = array<i32>} : memref<16x128xf32, #tpu.memory_space<vmem>>, vector<16x128xf32>,
    %c0_i32_8 = arith.constant 0 : i32
    %9 = arith.cmpi eq, %arg1, %c0_i32_8 : i32
    %10 = arith.extui %9 : i1 to i32
    %c0_i32_9 = arith.constant 0 : i32
    %11 = arith.cmpi ne, %10, %c0_i32_9 : i32
    scf.if %11 {
      %c0_10 = arith.constant 0 : index
      %c0_11 = arith.constant 0 : index
      %12 = vector.load %arg5[%c0_10, %c0_11] : memref<16x128xf32, #tpu.memory_space<vmem>>, vector<16x128xf32>
      %c0_12 = arith.constant 0 : index
      %c0_13 = arith.constant 0 : index
      %13 = vector.load %arg4[%c0_12, %c0_13] : memref<16x128xf32, #tpu.memory_space<vmem>>, vector<16x128xf32>
      tpu.vector_store %arg4[%c0_12, %c0_13], %12 {strides = array<i32>} : memref<16x128xf32, #tpu.memory_space<vmem>>, vector<16x128xf32>,
    } else {
    }
    return
  }
  func.func @transform_0(%arg0: i32, %arg1: i32) -> (i32, i32) {
    %c0_i32 = arith.constant 0 : i32
    return %arg0, %arg1 : i32, i32
  }
  func.func @transform_1(%arg0: i32, %arg1: i32) -> (i32, i32) {
    %c0_i32 = arith.constant 0 : i32
    %c0_i32_0 = arith.constant 0 : i32
    return %arg1, %c0_i32 : i32, i32
  }
  func.func @transform_2(%arg0: i32, %arg1: i32) -> (i32, i32) {
    %c0_i32 = arith.constant 0 : i32
    %c0_i32_0 = arith.constant 0 : i32
    return %arg0, %c0_i32 : i32, i32
  }
}

</mosaic_0001>

<llo_original>
// kernel: tpu_custom_call.1
$region0: #{tpu_custom_call.1}
  #allocation0 [shape = 'u32[]', space=smem, size = 0x4, offset = 0x4, fixed_abs, tag = 'smem constant byte address 0x4 - core index']
  #allocation1 [shape = 'u32[144,128]{1,0:T(1,128)}', space=vmem, size = 0x12000, scoped, tag = 'internal scratch']
  #allocation2 [shape = 'f32[16,128]{1,0:T(8,128)}', space=vmem, size = 0x2000, scoped, tag = 'scratch operand']
  %s0 = inlined_call_operand.hbm [shape: bf16[16,128], index: 0, kind: input, shape index: {}]
  %s1 = inlined_call_operand.hbm [shape: bf16[128,128], index: 1, kind: input, shape index: {}]
  %s2 = inlined_call_operand.hbm [shape: f32[16,128], index: 2, kind: output, shape index: {}]
  %s3 = sld [smem:[#allocation0]]
  $region34: #{tpu_custom_call.1} parent=0
    _
  %s5 = ssub.s32 1, %s3
  %s6 = scalar_select 0, %s5, %s3
  $region1: #{tpu_custom_call.1} parent=0
    #allocation3 [shape = 'u8[4096]{0}', space=vmem, size = 0x1000, scoped, tag = 'input window, operand 0, single buffered']
    #allocation4 [shape = 's32[1]{0}', space=sflag, size = 0x4, scoped, tag = 'scoped memory for tpu_custom_call.1']
    #allocation5 [shape = 's32[1]{0}', space=sflag, size = 0x4, scoped, tag = 'scoped memory for tpu_custom_call.1']
    #allocation6 [shape = 'u8[32768]{0}', space=vmem, size = 0x8000, scoped, tag = 'input window, operand 1, single buffered']
    #allocation7 [shape = 's32[1]{0}', space=sflag, size = 0x4, scoped, tag = 'scoped memory for tpu_custom_call.1']
    #allocation8 [shape = 'u8[8192]{0}', space=vmem, size = 0x2000, scoped, tag = 'output window, operand 0, single buffered']
    %7 = vsyncpa [#allocation4], 0
    %8 = vsyncpa [#allocation7], 0
    %9 = vsyncpa [#allocation5], 0
    // Predicated region
    $region2: #{tpu_custom_call.1} parent=1 // pred_check
      _
    $region3: #{tpu_custom_call.1} parent=1 // pred_check_branch
      %11 = sbr.rel (0) target = $region5
    $region4: #{tpu_custom_call.1} parent=1 // pred_region
      %s13 = ssub.s32 128, 128
      %14 = vsyncadd [#allocation4], %s13
      %s15 = sshll.u32 [#allocation3], 4
      %s16 = int_to_ptr.vmem [resolvable:$true] %s15
      %21 = dma.hbm_to_vmem [thread:$0]  %s0, 128, %s16, [#allocation4], 64, 64, 4
    $region5: #{tpu_custom_call.1} parent=1 // pred_fallthru
      _
    // Predicated region
    $region6: #{tpu_custom_call.1} parent=1 // pred_check
      _
    $region7: #{tpu_custom_call.1} parent=1 // pred_check_branch
      %23 = sbr.rel (0) target = $region9
    $region8: #{tpu_custom_call.1} parent=1 // pred_region
      %s25 = ssub.s32 1024, 1024
      %26 = vsyncadd [#allocation7], %s25
      %s27 = sshll.u32 [#allocation6], 4
      %s28 = int_to_ptr.vmem [resolvable:$true] %s27
      %33 = dma.hbm_to_vmem [thread:$0]  %s1, 1024, %s28, [#allocation7], 64, 64, 4
    $region9: #{tpu_custom_call.1} parent=1 // pred_fallthru
      _
    // Predicated region
    $region10: #{tpu_custom_call.1} parent=1 // pred_check
      _
    $region11: #{tpu_custom_call.1} parent=1 // pred_check_branch
      %35 = sbr.rel (0) target = $region13
    $region12: #{tpu_custom_call.1} parent=1 // pred_region
      %36 = dma.done [#allocation4], 128
    $region13: #{tpu_custom_call.1} parent=1 // pred_fallthru
      _
    // Predicated region
    $region14: #{tpu_custom_call.1} parent=1 // pred_check
      _
    $region15: #{tpu_custom_call.1} parent=1 // pred_check_branch
      %38 = sbr.rel (0) target = $region17
    $region16: #{tpu_custom_call.1} parent=1 // pred_region
      %39 = dma.done [#allocation7], 1024
    $region17: #{tpu_custom_call.1} parent=1 // pred_fallthru
      _
    %p41 = scmp.eq.s32.totalorder 0, 0
    // Predicated region
    $region18: #{tpu_custom_call.1} parent=1 // pred_check
      %p42 = pneg %p41
    $region19: #{tpu_custom_call.1} parent=1 // pred_check_branch
      %44 = sbr.rel (%p42) target = $region21
    $region20: #{tpu_custom_call.1} parent=1 // pred_region
      %45 = vst [vmem:[#allocation2] sm:$0xff] 0.0
      %46 = vst [vmem:[#allocation2 + $0x8] sm:$0xff] 0.0
    $region21: #{tpu_custom_call.1} parent=1 // pred_fallthru
      _
    %v47 = vld [vmem:[#allocation2] sm:$0xff]
    %v48 = vld [vmem:[#allocation2 + $0x8] sm:$0xff]
    %v49 = vld [vmem:[#allocation3] sm:$0xf]
    %v50 = vld [vmem:[#allocation3 + $0x4] sm:$0xf]
    %v51 = vld [vmem:[#allocation6] sm:$0xf]
    %v52 = vld [vmem:[#allocation6 + $0x4] sm:$0xf]
    %v53 = vld [vmem:[#allocation6 + $0x8] sm:$0xf]
    %v54 = vld [vmem:[#allocation6 + $0xc] sm:$0xf]
    %v55 = vld [vmem:[#allocation6 + $0x10] sm:$0xf]
    %v56 = vld [vmem:[#allocation6 + $0x14] sm:$0xf]
    %v57 = vld [vmem:[#allocation6 + $0x18] sm:$0xf]
    %v58 = vld [vmem:[#allocation6 + $0x1c] sm:$0xf]
    %v59 = vld [vmem:[#allocation6 + $0x20] sm:$0xf]
    %v60 = vld [vmem:[#allocation6 + $0x24] sm:$0xf]
    %v61 = vld [vmem:[#allocation6 + $0x28] sm:$0xf]
    %v62 = vld [vmem:[#allocation6 + $0x2c] sm:$0xf]
    %v63 = vld [vmem:[#allocation6 + $0x30] sm:$0xf]
    %v64 = vld [vmem:[#allocation6 + $0x34] sm:$0xf]
    %v65 = vld [vmem:[#allocation6 + $0x38] sm:$0xf]
    %v66 = vld [vmem:[#allocation6 + $0x3c] sm:$0xf]
    %v69 = vunpack.c.l.b16 %v49
    %v70 = vunpack.c.l.b16 %v50
    %v71 = vpack.c.b16 %v70, %v69
    %v89 = vunpack.c.l.b16 %v51
    %v90 = vunpack.c.l.b16 %v52
    %v91 = vunpack.c.l.b16 %v53
    %v92 = vunpack.c.l.b16 %v54
    %v93 = vunpack.c.l.b16 %v55
    %v94 = vunpack.c.l.b16 %v56
    %v95 = vunpack.c.l.b16 %v57
    %v96 = vunpack.c.l.b16 %v58
    %v97 = vunpack.c.l.b16 %v59
    %v98 = vunpack.c.l.b16 %v60
    %v99 = vunpack.c.l.b16 %v61
    %v100 = vunpack.c.l.b16 %v62
    %v101 = vunpack.c.l.b16 %v63
    %v102 = vunpack.c.l.b16 %v64
    %v103 = vunpack.c.l.b16 %v65
    %v104 = vunpack.c.l.b16 %v66
    %v105 = vpack.c.b16 %v90, %v89
    %v106 = vpack.c.b16 %v92, %v91
    %v107 = vpack.c.b16 %v94, %v93
    %v108 = vpack.c.b16 %v96, %v95
    %v109 = vpack.c.b16 %v98, %v97
    %v110 = vpack.c.b16 %v100, %v99
    %v111 = vpack.c.b16 %v102, %v101
    %v112 = vpack.c.b16 %v104, %v103
    %121 = vmatprep.subr.bf16.mxu0 0
    %122 = vmatpush1.bf16.msra.mxu0 %v105
    %123 = vmatprep.subr.bf16.mxu0 0
    %124 = vmatpush1.bf16.msra.mxu0 %v106
    %125 = vmatprep.subr.bf16.mxu0 0
    %126 = vmatpush1.bf16.msra.mxu0 %v107
    %127 = vmatprep.subr.bf16.mxu0 0
    %128 = vmatpush1.bf16.msra.mxu0 %v108
    %129 = vmatprep.subr.bf16.mxu0 0
    %130 = vmatpush1.bf16.msra.mxu0 %v109
    %131 = vmatprep.subr.bf16.mxu0 0
    %132 = vmatpush1.bf16.msra.mxu0 %v110
    %133 = vmatprep.subr.bf16.mxu0 0
    %134 = vmatpush1.bf16.msra.mxu0 %v111
    %135 = vmatprep.subr.bf16.mxu0 0
    %136 = vmatpush1.bf16.msra.mxu0 %v112
    %137 = vmatprep.subr.bf16.mxu0 0
    %138 = vmatpush1.bf16.msra.mxu0 0
    %139 = vmatprep.subr.bf16.mxu0 0
    %140 = vmatpush1.bf16.msra.mxu0 0
    %141 = vmatprep.subr.bf16.mxu0 0
    %142 = vmatpush1.bf16.msra.mxu0 0
    %143 = vmatprep.subr.bf16.mxu0 0
    %144 = vmatpush1.bf16.msra.mxu0 0
    %145 = vmatprep.subr.bf16.mxu0 0
    %146 = vmatpush1.bf16.msra.mxu0 0
    %147 = vmatprep.subr.bf16.mxu0 0
    %148 = vmatpush1.bf16.msra.mxu0 0
    %149 = vmatprep.subr.bf16.mxu0 0
    %150 = vmatpush1.bf16.msra.mxu0 0
    %151 = vmatprep.subr.bf16.mxu0 0
    %152 = vmatpush1.bf16.msra.mxu0 0
    %153 = vmatprep.mubr.bf16.mxu0 0
    %154 = vmatmul.mubr.bf16.gmra.mrb[0].mxu0 %v71
    %v155 = vpop.f32.mrb[0].mxu0
    %v156 = vadd.f32 0.0, %v155
    %v157 = vpop.f32.mrb[0].mxu0
    %v158 = vpop.f32.mrb[0].mxu0
    %v159 = vadd.f32 0.0, %v158
    %v160 = vpop.f32.mrb[0].mxu0
    %161 = vdwg.mxu0
    %v162 = vadd.f32 %v47, %v156
    %v163 = vadd.f32 %v48, %v159
    %164 = vst [vmem:[#allocation2] sm:$0xff] %v162
    %165 = vst [vmem:[#allocation2 + $0x8] sm:$0xff] %v163
    // Predicated region
    $region22: #{tpu_custom_call.1} parent=1 // pred_check
      %p166 = pneg %p41
    $region23: #{tpu_custom_call.1} parent=1 // pred_check_branch
      %168 = sbr.rel (%p166) target = $region25
    $region24: #{tpu_custom_call.1} parent=1 // pred_region
      %v169 = vld [vmem:[#allocation2] sm:$0xff]
      %v170 = vld [vmem:[#allocation2 + $0x8] sm:$0xff]
      %171 = vst [vmem:[#allocation8] sm:$0xff] %v169
      %172 = vst [vmem:[#allocation8 + $0x8] sm:$0xff] %v170
    $region25: #{tpu_custom_call.1} parent=1 // pred_fallthru
      _
    // Predicated region
    $region26: #{tpu_custom_call.1} parent=1 // pred_check
      _
    $region27: #{tpu_custom_call.1} parent=1 // pred_check_branch
      %174 = sbr.rel (0) target = $region29
    $region28: #{tpu_custom_call.1} parent=1 // pred_region
      %s176 = ssub.s32 256, 256
      %177 = vsyncadd [#allocation5], %s176
      %s178 = sshll.u32 [#allocation8], 4
      %s179 = int_to_ptr.vmem [resolvable:$true] %s178
      %184 = dma.vmem_to_hbm [thread:$0]  %s179, 256, %s2, [#allocation5], 128, 128, 8
    $region29: #{tpu_custom_call.1} parent=1 // pred_fallthru
      _
    // Predicated region
    $region30: #{tpu_custom_call.1} parent=1 // pred_check
      _
    $region31: #{tpu_custom_call.1} parent=1 // pred_check_branch
      %186 = sbr.rel (0) target = $region33
    $region32: #{tpu_custom_call.1} parent=1 // pred_region
      %187 = dma.done [#allocation5], 256
    $region33: #{tpu_custom_call.1} parent=1 // pred_fallthru
      _
    %188 = vsyncpa [#allocation4], 1
    %189 = vsyncpa [#allocation7], 1
    %190 = vsyncpa [#allocation5], 1

// kernel: tpu_custom_call.1
$region0: #{tpu_custom_call.1}
  #allocation0 [shape = 'u32[]', space=smem, size = 0x4, offset = 0x4, fixed_abs, tag = 'smem constant byte address 0x4 - core index']
  #allocation1 [shape = 'u32[144,128]{1,0:T(1,128)}', space=vmem, size = 0x12000, scoped, tag = 'internal scratch']
  #allocation2 [shape = 'f32[16,128]{1,0:T(8,128)}', space=vmem, size = 0x2000, scoped, tag = 'scratch operand']
  %s0 = inlined_call_operand.hbm [shape: bf16[16,128], index: 0, kind: input, shape index: {}]
  %s1 = inlined_call_operand.hbm [shape: bf16[128,128], index: 1, kind: input, shape index: {}]
  %s2 = inlined_call_operand.hbm [shape: f32[16,128], index: 2, kind: output, shape index: {}]
  %s3 = sld [smem:[#allocation0]]
  $region34: #{tpu_custom_call.1} parent=0
    _
  %s5 = ssub.s32 1, %s3
  %s6 = scalar_select 0, %s5, %s3
  $region1: #{tpu_custom_call.1} parent=0
    #allocation3 [shape = 'u8[4096]{0}', space=vmem, size = 0x1000, scoped, tag = 'input window, operand 0, single buffered']
    #allocation4 [shape = 's32[1]{0}', space=sflag, size = 0x4, scoped, tag = 'scoped memory for tpu_custom_call.1']
    #allocation5 [shape = 's32[1]{0}', space=sflag, size = 0x4, scoped, tag = 'scoped memory for tpu_custom_call.1']
    #allocation6 [shape = 'u8[32768]{0}', space=vmem, size = 0x8000, scoped, tag = 'input window, operand 1, single buffered']
    #allocation7 [shape = 's32[1]{0}', space=sflag, size = 0x4, scoped, tag = 'scoped memory for tpu_custom_call.1']
    #allocation8 [shape = 'u8[8192]{0}', space=vmem, size = 0x2000, scoped, tag = 'output window, operand 0, single buffered']
    %7 = vsyncpa [#allocation4], 0
    %8 = vsyncpa [#allocation7], 0
    %9 = vsyncpa [#allocation5], 0
    // Predicated region
    $region2: #{tpu_custom_call.1} parent=1 // pred_check
      _
    $region3: #{tpu_custom_call.1} parent=1 // pred_check_branch
      %11 = sbr.rel (0) target = $region5
    $region4: #{tpu_custom_call.1} parent=1 // pred_region
      %s13 = ssub.s32 128, 128
      %14 = vsyncadd [#allocation4], %s13
      %s15 = sshll.u32 [#allocation3], 4
      %s16 = int_to_ptr.vmem [resolvable:$true] %s15
      %21 = dma.hbm_to_vmem [thread:$0]  %s0, 128, %s16, [#allocation4], 64, 64, 4
    $region5: #{tpu_custom_call.1} parent=1 // pred_fallthru
      _
    // Predicated region
    $region6: #{tpu_custom_call.1} parent=1 // pred_check
      _
    $region7: #{tpu_custom_call.1} parent=1 // pred_check_branch
      %23 = sbr.rel (0) target = $region9
    $region8: #{tpu_custom_call.1} parent=1 // pred_region
      %s25 = ssub.s32 1024, 1024
      %26 = vsyncadd [#allocation7], %s25
      %s27 = sshll.u32 [#allocation6], 4
      %s28 = int_to_ptr.vmem [resolvable:$true] %s27
      %33 = dma.hbm_to_vmem [thread:$0]  %s1, 1024, %s28, [#allocation7], 64, 64, 4
    $region9: #{tpu_custom_call.1} parent=1 // pred_fallthru
      _
    // Predicated region
    $region10: #{tpu_custom_call.1} parent=1 // pred_check
      _
    $region11: #{tpu_custom_call.1} parent=1 // pred_check_branch
      %35 = sbr.rel (0) target = $region13
    $region12: #{tpu_custom_call.1} parent=1 // pred_region
      %36 = dma.done [#allocation4], 128
    $region13: #{tpu_custom_call.1} parent=1 // pred_fallthru
      _
    // Predicated region
    $region14: #{tpu_custom_call.1} parent=1 // pred_check
      _
    $region15: #{tpu_custom_call.1} parent=1 // pred_check_branch
      %38 = sbr.rel (0) target = $region17
    $region16: #{tpu_custom_call.1} parent=1 // pred_region
      %39 = dma.done [#allocation7], 1024
    $region17: #{tpu_custom_call.1} parent=1 // pred_fallthru
      _
    %p41 = scmp.eq.s32.totalorder 0, 0
    // Predicated region
    $region18: #{tpu_custom_call.1} parent=1 // pred_check
      %p42 = pneg %p41
    $region19: #{tpu_custom_call.1} parent=1 // pred_check_branch
      %44 = sbr.rel (%p42) target = $region21
    $region20: #{tpu_custom_call.1} parent=1 // pred_region
      %45 = vst [vmem:[#allocation2] sm:$0xff] 0.0
      %46 = vst [vmem:[#allocation2 + $0x8] sm:$0xff] 0.0
    $region21: #{tpu_custom_call.1} parent=1 // pred_fallthru
      _
    %v47 = vld [vmem:[#allocation2] sm:$0xff]
    %v48 = vld [vmem:[#allocation2 + $0x8] sm:$0xff]
    %v49 = vld [vmem:[#allocation3] sm:$0xf]
    %v50 = vld [vmem:[#allocation3 + $0x4] sm:$0xf]
    %v51 = vld [vmem:[#allocation6] sm:$0xf]
    %v52 = vld [vmem:[#allocation6 + $0x4] sm:$0xf]
    %v53 = vld [vmem:[#allocation6 + $0x8] sm:$0xf]
    %v54 = vld [vmem:[#allocation6 + $0xc] sm:$0xf]
    %v55 = vld [vmem:[#allocation6 + $0x10] sm:$0xf]
    %v56 = vld [vmem:[#allocation6 + $0x14] sm:$0xf]
    %v57 = vld [vmem:[#allocation6 + $0x18] sm:$0xf]
    %v58 = vld [vmem:[#allocation6 + $0x1c] sm:$0xf]
    %v59 = vld [vmem:[#allocation6 + $0x20] sm:$0xf]
    %v60 = vld [vmem:[#allocation6 + $0x24] sm:$0xf]
    %v61 = vld [vmem:[#allocation6 + $0x28] sm:$0xf]
    %v62 = vld [vmem:[#allocation6 + $0x2c] sm:$0xf]
    %v63 = vld [vmem:[#allocation6 + $0x30] sm:$0xf]
    %v64 = vld [vmem:[#allocation6 + $0x34] sm:$0xf]
    %v65 = vld [vmem:[#allocation6 + $0x38] sm:$0xf]
    %v66 = vld [vmem:[#allocation6 + $0x3c] sm:$0xf]
    %v69 = vunpack.c.l.b16 %v49
    %v70 = vunpack.c.l.b16 %v50
    %v71 = vpack.c.b16 %v70, %v69
    %v89 = vunpack.c.l.b16 %v51
    %v90 = vunpack.c.l.b16 %v52
    %v91 = vunpack.c.l.b16 %v53
    %v92 = vunpack.c.l.b16 %v54
    %v93 = vunpack.c.l.b16 %v55
    %v94 = vunpack.c.l.b16 %v56
    %v95 = vunpack.c.l.b16 %v57
    %v96 = vunpack.c.l.b16 %v58
    %v97 = vunpack.c.l.b16 %v59
    %v98 = vunpack.c.l.b16 %v60
    %v99 = vunpack.c.l.b16 %v61
    %v100 = vunpack.c.l.b16 %v62
    %v101 = vunpack.c.l.b16 %v63
    %v102 = vunpack.c.l.b16 %v64
    %v103 = vunpack.c.l.b16 %v65
    %v104 = vunpack.c.l.b16 %v66
    %v105 = vpack.c.b16 %v90, %v89
    %v106 = vpack.c.b16 %v92, %v91
    %v107 = vpack.c.b16 %v94, %v93
    %v108 = vpack.c.b16 %v96, %v95
    %v109 = vpack.c.b16 %v98, %v97
    %v110 = vpack.c.b16 %v100, %v99
    %v111 = vpack.c.b16 %v102, %v101
    %v112 = vpack.c.b16 %v104, %v103
    %121 = vmatprep.subr.bf16.mxu0 0
    %122 = vmatpush1.bf16.msra.mxu0 %v105
    %123 = vmatprep.subr.bf16.mxu0 0
    %124 = vmatpush1.bf16.msra.mxu0 %v106
    %125 = vmatprep.subr.bf16.mxu0 0
    %126 = vmatpush1.bf16.msra.mxu0 %v107
    %127 = vmatprep.subr.bf16.mxu0 0
    %128 = vmatpush1.bf16.msra.mxu0 %v108
    %129 = vmatprep.subr.bf16.mxu0 0
    %130 = vmatpush1.bf16.msra.mxu0 %v109
    %131 = vmatprep.subr.bf16.mxu0 0
    %132 = vmatpush1.bf16.msra.mxu0 %v110
    %133 = vmatprep.subr.bf16.mxu0 0
    %134 = vmatpush1.bf16.msra.mxu0 %v111
    %135 = vmatprep.subr.bf16.mxu0 0
    %136 = vmatpush1.bf16.msra.mxu0 %v112
    %137 = vmatprep.subr.bf16.mxu0 0
    %138 = vmatpush1.bf16.msra.mxu0 0
    %139 = vmatprep.subr.bf16.mxu0 0
    %140 = vmatpush1.bf16.msra.mxu0 0
    %141 = vmatprep.subr.bf16.mxu0 0
    %142 = vmatpush1.bf16.msra.mxu0 0
    %143 = vmatprep.subr.bf16.mxu0 0
    %144 = vmatpush1.bf16.msra.mxu0 0
    %145 = vmatprep.subr.bf16.mxu0 0
    %146 = vmatpush1.bf16.msra.mxu0 0
    %147 = vmatprep.subr.bf16.mxu0 0
    %148 = vmatpush1.bf16.msra.mxu0 0
    %149 = vmatprep.subr.bf16.mxu0 0
    %150 = vmatpush1.bf16.msra.mxu0 0
    %151 = vmatprep.subr.bf16.mxu0 0
    %152 = vmatpush1.bf16.msra.mxu0 0
    %153 = vmatprep.mubr.bf16.mxu0 0
    %154 = vmatmul.mubr.bf16.gmra.mrb[0].mxu0 %v71
    %v155 = vpop.f32.mrb[0].mxu0
    %v156 = vadd.f32 0.0, %v155
    %v157 = vpop.f32.mrb[0].mxu0
    %v158 = vpop.f32.mrb[0].mxu0
    %v159 = vadd.f32 0.0, %v158
    %v160 = vpop.f32.mrb[0].mxu0
    %161 = vdwg.mxu0
    %v162 = vadd.f32 %v47, %v156
    %v163 = vadd.f32 %v48, %v159
    %164 = vst [vmem:[#allocation2] sm:$0xff] %v162
    %165 = vst [vmem:[#allocation2 + $0x8] sm:$0xff] %v163
    // Predicated region
    $region22: #{tpu_custom_call.1} parent=1 // pred_check
      %p166 = pneg %p41
    $region23: #{tpu_custom_call.1} parent=1 // pred_check_branch
      %168 = sbr.rel (%p166) target = $region25
    $region24: #{tpu_custom_call.1} parent=1 // pred_region
      %v169 = vld [vmem:[#allocation2] sm:$0xff]
      %v170 = vld [vmem:[#allocation2 + $0x8] sm:$0xff]
      %171 = vst [vmem:[#allocation8] sm:$0xff] %v169
      %172 = vst [vmem:[#allocation8 + $0x8] sm:$0xff] %v170
    $region25: #{tpu_custom_call.1} parent=1 // pred_fallthru
      _
    // Predicated region
    $region26: #{tpu_custom_call.1} parent=1 // pred_check
      _
    $region27: #{tpu_custom_call.1} parent=1 // pred_check_branch
      %174 = sbr.rel (0) target = $region29
    $region28: #{tpu_custom_call.1} parent=1 // pred_region
      %s176 = ssub.s32 256, 256
      %177 = vsyncadd [#allocation5], %s176
      %s178 = sshll.u32 [#allocation8], 4
      %s179 = int_to_ptr.vmem [resolvable:$true] %s178
      %184 = dma.vmem_to_hbm [thread:$0]  %s179, 256, %s2, [#allocation5], 128, 128, 8
    $region29: #{tpu_custom_call.1} parent=1 // pred_fallthru
      _
    // Predicated region
    $region30: #{tpu_custom_call.1} parent=1 // pred_check
      _
    $region31: #{tpu_custom_call.1} parent=1 // pred_check_branch
      %186 = sbr.rel (0) target = $region33
    $region32: #{tpu_custom_call.1} parent=1 // pred_region
      %187 = dma.done [#allocation5], 256
    $region33: #{tpu_custom_call.1} parent=1 // pred_fallthru
      _
    %188 = vsyncpa [#allocation4], 1
    %189 = vsyncpa [#allocation7], 1
    %190 = vsyncpa [#allocation5], 1

</llo_original>
